<compile_context>
chip_gen: v7x
topology: tpu7x:2x2x1
jax: 0.10.0
libtpu: 0.0.40
codegen_flags: <defaults>
</compile_context>

<pallas_src>
import jax
import jax.numpy as jnp
from jax.experimental import pallas as pl
from jax.experimental.pallas import tpu as pltpu


def attention_kernel(hid_ref, enc_ref, mask_ref, w_h_ref, w_e_ref, b_ref, v_ref,
                     out_ref):
    # hid_ref : (Bb, H)       decoder hidden tile               (MXU dtype)
    # enc_ref : (T, Bb, 2E)   seq-major encoder tile            (MXU dtype)
    # mask_ref: (T, Bb)       int32 mask (transposed in wrapper; tiny)
    # w_h_ref : (H, H)        attn-weight rows acting on `hidden`
    # w_e_ref : (2E, H)       attn-weight rows acting on `encoder_outputs`
    # b_ref   : (1, H) f32    attn bias
    # v_ref   : (1, H) f32    v weight (row vector)
    # out_ref : (T, Bb) f32   softmax over T (axis 0); Bb is the lane axis
    T, Bb, E2 = enc_ref.shape
    H = w_h_ref.shape[1]

    # Hidden projection once per batch row (not T times); bias folded in; f32 acc.
    hid_proj = jnp.dot(hid_ref[...], w_h_ref[...],
                       preferred_element_type=jnp.float32) + b_ref[...]        # (Bb, H)

    # Encoder projection: collapse (T, Bb) into one large MXU M dimension.
    # This reshape is a free relayout when Bb % 8 == 0 (wrapper picks block_b so).
    enc_flat = enc_ref[...].reshape(T * Bb, E2)
    enc_proj = jnp.dot(enc_flat, w_e_ref[...],
                       preferred_element_type=jnp.float32).reshape(T, Bb, H)

    # Post-matmul math in f32 (safe on v5e's f32-only VPU/EUP as well).
    energy = jnp.tanh(enc_proj + hid_proj[None, :, :])                         # (T, Bb, H)

    # v-projection as VPU broadcast-multiply + XLU lane reduction (avoids a
    # lane-width-1 MXU output buffer).
    att = jnp.sum(energy * v_ref[...].reshape(1, 1, H), axis=-1)               # (T, Bb)

    # masked_fill(mask == 0, -1e-10) -- bit-for-bit with the PyTorch source.
    # NOTE: -1e-10 ~ 0, so masked positions are NOT truly suppressed; this
    # replicates the reference behaviour on purpose (use -inf for true masking).
    att = jnp.where(mask_ref[...] == 0, jnp.float32(-1e-10), att)

    # Softmax over T (axis 0). Reciprocal lives on the (otherwise idle) EUP slot.
    m = jnp.max(att, axis=0, keepdims=True)
    e = jnp.exp(att - m)
    denom = jnp.sum(e, axis=0, keepdims=True)
    out_ref[...] = e * pl.reciprocal(denom, approx=True)


def _pick_block_b(B, T, E2, H, itemsize):
    """Batch-tile size: big flattened-M, VMEM-bounded (v7x-safe), lane-dense."""
    if B <= 128:
        return B                                     # one tile; blocks == full dims
    # Per batch row per grid step: double-buffered encoder tile + f32 temps
    # (enc_proj, energy, att) + small mask/out slabs.
    per_row = T * (2 * E2 * itemsize + 3 * H * 4 + 12)
    vmem_budget = 24 << 20                           # conservative: v7x has 64 MiB VMEM
    rows_vmem = max(128, int(vmem_budget // max(per_row, 1)))
    rows_target = max(128, 2048 // max(T, 1))        # flattened (block_b*T, 2E) M target
    cand = min(B, rows_vmem, rows_target)
    if cand >= B and B >= 256:
        cand = pl.cdiv(B, 2)                         # >= 2 grid steps: v7x megacore split
    return max(128, (cand // 128) * 128)             # lane-dense [T, block_b] output


def attention_forward(hidden, encoder_outputs, mask, w_attn, b_attn, w_v,
                      *, block_b=None, input_dtype=jnp.bfloat16):
    """hidden [B,H], encoder_outputs [T,B,2E] (seq-major), mask [B,T] -> [B,T].

    input_dtype: dtype of the MXU operands (encoder, hidden, split attn weights).
    bfloat16 (default) halves HBM traffic of the dominant encoder read on all TPU
    generations (MXU still accumulates in f32); pass jnp.float32 for near-exact
    parity with an f32 reference.
    """
    T, B, E2 = encoder_outputs.shape
    H = hidden.shape[1]
    itemsize = jnp.dtype(input_dtype).itemsize

    if block_b is None:
        block_b = _pick_block_b(B, T, E2, H, itemsize)
    block_b = min(block_b, B)
    grid_b = pl.cdiv(B, block_b)

    # No HBM transpose / pad of the dominant tensor: consumed seq-major as-is.
    enc = encoder_outputs.astype(input_dtype)            # [T, B, 2E]
    hid = hidden.astype(input_dtype)                     # [B, H]
    mask_t = jnp.transpose(mask).astype(jnp.int32)       # [T, B]  (tiny)

    # Split attn weight: PyTorch concatenates [hidden ; encoder_outputs], so the
    # first H input columns of w_attn act on hidden, the remaining 2E on the
    # encoder outputs.  This removes the hidden-repeat / concat entirely.
    w_t = jnp.transpose(w_attn).astype(input_dtype)      # [H + 2E, H]
    w_h = w_t[:H, :]                                     # [H, H]
    w_e = w_t[H:, :]                                     # [2E, H]
    b = b_attn.reshape(1, H).astype(jnp.float32)
    v = w_v.reshape(1, H).astype(jnp.float32)

    # Advisory cost for XLA's scheduler.
    flops = 2 * B * T * E2 * H + 2 * B * H * H + 3 * B * T * H
    transcendentals = B * T * H + B * T
    bytes_accessed = ((T * B * E2 + B * H + (H + E2) * H) * itemsize
                      + B * T * 4 + T * B * 4)
    cost = pl.CostEstimate(flops=flops, transcendentals=transcendentals,
                           bytes_accessed=bytes_accessed)

    # Explicit VMEM limit, capped so the same choice is legal on v7x (64 MiB).
    est_vmem = (block_b * T * (2 * E2 * itemsize + 3 * H * 4 + 12)
                + 2 * (H + E2) * H * itemsize + 8 * H)
    vmem_limit = int(min(64 << 20, max(16 << 20, 2 * est_vmem)))

    out_tb = pl.pallas_call(
        attention_kernel,
        out_shape=jax.ShapeDtypeStruct((T, B), jnp.float32),
        grid_spec=pltpu.PrefetchScalarGridSpec(
            num_scalar_prefetch=0,
            grid=(grid_b,),
            in_specs=[
                pl.BlockSpec((block_b, H), lambda i: (i, 0)),           # hidden
                pl.BlockSpec((T, block_b, E2), lambda i: (0, i, 0)),    # encoder (seq-major)
                pl.BlockSpec((T, block_b), lambda i: (0, i)),           # mask (transposed)
                pl.BlockSpec((H, H), lambda i: (0, 0)),                 # w_h (resident)
                pl.BlockSpec((E2, H), lambda i: (0, 0)),                # w_e (resident)
                pl.BlockSpec((1, H), lambda i: (0, 0)),                 # bias
                pl.BlockSpec((1, H), lambda i: (0, 0)),                 # v
            ],
            out_specs=pl.BlockSpec((T, block_b), lambda i: (0, i)),
        ),
        compiler_params=pltpu.CompilerParams(
            dimension_semantics=("parallel",),
            vmem_limit_bytes=vmem_limit,
            # Let XLA fuse the producer of the big encoder operand (dtype cast
            # and/or an upstream transpose) into the kernel's input DMA instead
            # of materializing another HBM copy.
            allow_input_fusion=[False, True, False, False, False, False, False],
        ),
        cost_estimate=cost,
    )(hid, enc, mask_t, w_h, w_e, b, v)

    # Only the tiny [T, B] result gets transposed back to the PyTorch layout.
    return jnp.transpose(out_tb)                          # [B, T]


def attention_reference(hidden, encoder_outputs, mask, w_attn, b_attn, w_v):
    """Pure-JAX reference mirroring the PyTorch forward exactly."""
    T, B, _ = encoder_outputs.shape
    hid = jnp.broadcast_to(hidden[:, None, :], (B, T, hidden.shape[1]))
    enc = jnp.transpose(encoder_outputs, (1, 0, 2))
    cat = jnp.concatenate([hid, enc], axis=2)
    energy = jnp.tanh(cat @ w_attn.T + b_attn)
    attention = (energy @ w_v.T)[:, :, 0]
    attention = jnp.where(mask == 0, jnp.float32(-1e-10), attention)
    return jax.nn.softmax(attention, axis=1)


if __name__ == "__main__":
    B, T, ENC, DEC = 2, 8, 16, 32
    D_in = 2 * ENC + DEC

    key = jax.random.PRNGKey(0)
    k1, k2, k3, k4, k5, k6 = jax.random.split(key, 6)

    hidden = jax.random.normal(k1, (B, DEC), jnp.float32)
    encoder_outputs = jax.random.normal(k2, (T, B, 2 * ENC), jnp.float32)
    mask = (jax.random.uniform(k3, (B, T)) > 0.3).astype(jnp.int32)

    # Deterministic parameter init (nn.Linear-style uniform bounds)
    lim_a = 1.0 / (D_in ** 0.5)
    w_attn = jax.random.uniform(k4, (DEC, D_in), jnp.float32, -lim_a, lim_a)
    b_attn = jax.random.uniform(k5, (DEC,), jnp.float32, -lim_a, lim_a)
    lim_v = 1.0 / (DEC ** 0.5)
    w_v = jax.random.uniform(k6, (1, DEC), jnp.float32, -lim_v, lim_v)

    ref = attention_reference(hidden, encoder_outputs, mask, w_attn, b_attn, w_v)

    # f32 MXU operands: near-exact parity (slack only for the approx reciprocal).
    out_f32 = jax.block_until_ready(
        attention_forward(hidden, encoder_outputs, mask, w_attn, b_attn, w_v,
                          input_dtype=jnp.float32))
    assert out_f32.shape == (B, T)
    assert jnp.allclose(out_f32, ref, atol=2e-3, rtol=2e-3), (out_f32, ref)
    assert jnp.allclose(jnp.sum(out_f32, axis=1), 1.0, atol=5e-3)

    # Default bf16 MXU operands (halves HBM traffic of the dominant encoder read).
    out_bf16 = jax.block_until_ready(
        attention_forward(hidden, encoder_outputs, mask, w_attn, b_attn, w_v))
    assert out_bf16.shape == (B, T)
    assert jnp.allclose(out_bf16, ref, atol=2e-2, rtol=2e-2), (out_bf16, ref)

    print("KERNEL_OK")
</pallas_src>

<mosaic_0001>
module attributes {stable_mosaic.version = 11 : i64} {
  func.func @attention_kernel(%arg0: i32, %arg1: memref<2x32xf32, #tpu.memory_space<vmem>>, %arg2: memref<8x2x32xf32, #tpu.memory_space<vmem>>, %arg3: memref<8x2xi32, #tpu.memory_space<vmem>>, %arg4: memref<32x32xf32, #tpu.memory_space<vmem>>, %arg5: memref<32x32xf32, #tpu.memory_space<vmem>>, %arg6: memref<1x32xf32, #tpu.memory_space<vmem>>, %arg7: memref<1x32xf32, #tpu.memory_space<vmem>>, %arg8: memref<8x2xf32, #tpu.memory_space<vmem>>) attributes {dimension_semantics = [#tpu.dimension_semantics<parallel>], iteration_bounds = array<i64: 1>, scalar_prefetch = 0 : i64, scratch_operands = 0 : i64, tpu.core_type = #tpu.core_type<tc>, window_params = [{transform_indices = @transform_0, window_bounds = array<i64: 2, 32>}, {transform_indices = @transform_1, window_bounds = array<i64: 8, 2, 32>}, {transform_indices = @transform_2, window_bounds = array<i64: 8, 2>}, {pipeline_mode = #tpu.pipeline_mode<synchronous>, transform_indices = @transform_3, window_bounds = array<i64: 32, 32>}, {pipeline_mode = #tpu.pipeline_mode<synchronous>, transform_indices = @transform_4, window_bounds = array<i64: 32, 32>}, {pipeline_mode = #tpu.pipeline_mode<synchronous>, transform_indices = @transform_5, window_bounds = array<i64: 1, 32>}, {pipeline_mode = #tpu.pipeline_mode<synchronous>, transform_indices = @transform_6, window_bounds = array<i64: 1, 32>}, {transform_indices = @transform_7, window_bounds = array<i64: 8, 2>}]} {
    %c0 = arith.constant 0 : index
    %c0_0 = arith.constant 0 : index
    %0 = vector.load %arg1[%c0, %c0_0] : memref<2x32xf32, #tpu.memory_space<vmem>>, vector<2x32xf32>
    %c0_1 = arith.constant 0 : index
    %c0_2 = arith.constant 0 : index
    %1 = vector.load %arg4[%c0_1, %c0_2] : memref<32x32xf32, #tpu.memory_space<vmem>>, vector<32x32xf32>
    %cst = arith.constant dense<0.000000e+00> : vector<2x32xf32>
    %2 = tpu.matmul %0, %1, %cst {dimension_numbers = #tpu.dot_dimension_numbers<[1], [0], [0], [1], [0, 0, 1, 1], [], []>} : vector<2x32xf32>, vector<32x32xf32>, vector<2x32xf32> -> vector<2x32xf32>
    %c0_3 = arith.constant 0 : index
    %c0_4 = arith.constant 0 : index
    %3 = vector.load %arg6[%c0_3, %c0_4] : memref<1x32xf32, #tpu.memory_space<vmem>>, vector<1x32xf32>
    %4 = vector.broadcast %3 : vector<1x32xf32> to vector<2x32xf32>
    %5 = arith.addf %2, %4 : vector<2x32xf32>
    %c0_5 = arith.constant 0 : index
    %c0_6 = arith.constant 0 : index
    %c0_7 = arith.constant 0 : index
    %6 = vector.load %arg2[%c0_5, %c0_6, %c0_7] : memref<8x2x32xf32, #tpu.memory_space<vmem>>, vector<8x2x32xf32>
    %7 = vector.shape_cast %6 : vector<8x2x32xf32> to vector<16x32xf32>
    %c0_8 = arith.constant 0 : index
    %c0_9 = arith.constant 0 : index
    %8 = vector.load %arg5[%c0_8, %c0_9] : memref<32x32xf32, #tpu.memory_space<vmem>>, vector<32x32xf32>
    %cst_10 = arith.constant dense<0.000000e+00> : vector<16x32xf32>
    %9 = tpu.matmul %7, %8, %cst_10 {dimension_numbers = #tpu.dot_dimension_numbers<[1], [0], [0], [1], [0, 0, 1, 1], [], []>} : vector<16x32xf32>, vector<32x32xf32>, vector<16x32xf32> -> vector<16x32xf32>
    %10 = vector.shape_cast %9 : vector<16x32xf32> to vector<8x2x32xf32>
    %11 = vector.shape_cast %5 : vector<2x32xf32> to vector<1x2x32xf32>
    %12 = vector.broadcast %11 : vector<1x2x32xf32> to vector<8x2x32xf32>
    %13 = arith.addf %10, %12 : vector<8x2x32xf32>
    %14 = math.tanh %13 : vector<8x2x32xf32>
    %c0_11 = arith.constant 0 : index
    %c0_12 = arith.constant 0 : index
    %15 = vector.load %arg7[%c0_11, %c0_12] : memref<1x32xf32, #tpu.memory_space<vmem>>, vector<1x32xf32>
    %16 = vector.shape_cast %15 : vector<1x32xf32> to vector<1x1x32xf32>
    %17 = vector.broadcast %16 : vector<1x1x32xf32> to vector<8x2x32xf32>
    %18 = arith.mulf %14, %17 : vector<8x2x32xf32>
    %cst_13 = arith.constant dense<0.000000e+00> : vector<8x2xf32>
    %19 = vector.multi_reduction <add>, %18, %cst_13 [2] : vector<8x2x32xf32> to vector<8x2xf32>
    %c0_14 = arith.constant 0 : index
    %c0_15 = arith.constant 0 : index
    %20 = vector.load %arg3[%c0_14, %c0_15] : memref<8x2xi32, #tpu.memory_space<vmem>>, vector<8x2xi32>
    %c0_i32 = arith.constant 0 : i32
    %21 = vector.broadcast %c0_i32 : i32 to vector<8x2xi32>
    %22 = arith.cmpi eq, %20, %21 : vector<8x2xi32>
    %cst_16 = arith.constant -1.000000e-10 : f32
    %23 = vector.broadcast %cst_16 : f32 to vector<8x2xf32>
    %24 = arith.select %22, %23, %19 : vector<8x2xi1>, vector<8x2xf32>
    %cst_17 = arith.constant dense<0xFF800000> : vector<2xf32>
    %25 = vector.multi_reduction <maximumf>, %24, %cst_17 [0] : vector<8x2xf32> to vector<2xf32>
    %26 = vector.shape_cast %25 : vector<2xf32> to vector<1x2xf32>
    %27 = vector.broadcast %26 : vector<1x2xf32> to vector<8x2xf32>
    %28 = arith.subf %24, %27 : vector<8x2xf32>
    %29 = math.exp %28 : vector<8x2xf32>
    %cst_18 = arith.constant dense<0.000000e+00> : vector<2xf32>
    %30 = vector.multi_reduction <add>, %29, %cst_18 [0] : vector<8x2xf32> to vector<2xf32>
    %31 = vector.shape_cast %30 : vector<2xf32> to vector<1x2xf32>
    %32 = tpu.reciprocal %31 {approx = true} : vector<1x2xf32> -> vector<1x2xf32>
    %33 = vector.broadcast %32 : vector<1x2xf32> to vector<8x2xf32>
    %34 = arith.mulf %29, %33 : vector<8x2xf32>
    %c0_19 = arith.constant 0 : index
    %c0_20 = arith.constant 0 : index
    %35 = vector.load %arg8[%c0_19, %c0_20] : memref<8x2xf32, #tpu.memory_space<vmem>>, vector<8x2xf32>
    tpu.vector_store %arg8[%c0_19, %c0_20], %34 {strides = array<i32>} : memref<8x2xf32, #tpu.memory_space<vmem>>, vector<8x2xf32>,
    return
  }
  func.func @transform_0(%arg0: i32) -> (i32, i32) {
    %c0_i32 = arith.constant 0 : i32
    %c0_i32_0 = arith.constant 0 : i32
    return %arg0, %c0_i32 : i32, i32
  }
  func.func @transform_1(%arg0: i32) -> (i32, i32, i32) {
    %c0_i32 = arith.constant 0 : i32
    %c0_i32_0 = arith.constant 0 : i32
    %c0_i32_1 = arith.constant 0 : i32
    return %c0_i32, %arg0, %c0_i32_0 : i32, i32, i32
  }
  func.func @transform_2(%arg0: i32) -> (i32, i32) {
    %c0_i32 = arith.constant 0 : i32
    %c0_i32_0 = arith.constant 0 : i32
    return %c0_i32, %arg0 : i32, i32
  }
  func.func @transform_3(%arg0: i32) -> (i32, i32) {
    %c0_i32 = arith.constant 0 : i32
    %c0_i32_0 = arith.constant 0 : i32
    %c0_i32_1 = arith.constant 0 : i32
    return %c0_i32, %c0_i32_0 : i32, i32
  }
  func.func @transform_4(%arg0: i32) -> (i32, i32) {
    %c0_i32 = arith.constant 0 : i32
    %c0_i32_0 = arith.constant 0 : i32
    %c0_i32_1 = arith.constant 0 : i32
    return %c0_i32, %c0_i32_0 : i32, i32
  }
  func.func @transform_5(%arg0: i32) -> (i32, i32) {
    %c0_i32 = arith.constant 0 : i32
    %c0_i32_0 = arith.constant 0 : i32
    %c0_i32_1 = arith.constant 0 : i32
    return %c0_i32, %c0_i32_0 : i32, i32
  }
  func.func @transform_6(%arg0: i32) -> (i32, i32) {
    %c0_i32 = arith.constant 0 : i32
    %c0_i32_0 = arith.constant 0 : i32
    %c0_i32_1 = arith.constant 0 : i32
    return %c0_i32, %c0_i32_0 : i32, i32
  }
  func.func @transform_7(%arg0: i32) -> (i32, i32) {
    %c0_i32 = arith.constant 0 : i32
    %c0_i32_0 = arith.constant 0 : i32
    return %c0_i32, %arg0 : i32, i32
  }
}

</mosaic_0001>

<llo_original>
// kernel: tpu_custom_call.1
$region0: #{tpu_custom_call.1}
  #allocation0 [shape = 'u32[]', space=smem, size = 0x4, offset = 0x4, fixed_abs, tag = 'smem constant byte address 0x4 - core index']
  #allocation1 [shape = 'u32[144,128]{1,0:T(1,128)}', space=vmem, size = 0x12000, scoped, tag = 'internal scratch']
  %s0 = inlined_call_operand.vmem [shape: f32[2,32], index: 0, kind: input, shape index: {}]
  %s1 = inlined_call_operand.hbm [shape: f32[8,2,32], index: 1, kind: input, shape index: {}]
  %s2 = inlined_call_operand.vmem [shape: s32[8,2], index: 2, kind: input, shape index: {}]
  %s3 = inlined_call_operand.hbm [shape: f32[32,32], index: 3, kind: input, shape index: {}]
  %s4 = inlined_call_operand.hbm [shape: f32[32,32], index: 4, kind: input, shape index: {}]
  %s5 = inlined_call_operand.vmem [shape: f32[1,32], index: 5, kind: input, shape index: {}]
  %s6 = inlined_call_operand.vmem [shape: f32[1,32], index: 6, kind: input, shape index: {}]
  %s7 = inlined_call_operand.vmem [shape: f32[8,2], index: 7, kind: output, shape index: {}]
  %s8 = sld [smem:[#allocation0]]
  $region50: #{tpu_custom_call.1} parent=0
    _
  %s10 = ssub.s32 1, %s8
  %s11 = scalar_select 0, %s10, %s8
  $region1: #{tpu_custom_call.1} parent=0
    #allocation2 [shape = 'u8[8192]{0}', space=vmem, size = 0x2000, scoped, tag = 'input window, operand 1, single buffered']
    #allocation3 [shape = 's32[1]{0}', space=sflag, size = 0x4, scoped, tag = 'scoped memory for tpu_custom_call.1']
    #allocation4 [shape = 'u8[16384]{0}', space=vmem, size = 0x4000, scoped, tag = 'input window, operand 3, single buffered']
    #allocation5 [shape = 's32[1]{0}', space=sflag, size = 0x4, scoped, tag = 'scoped memory for tpu_custom_call.1']
    #allocation6 [shape = 'u8[16384]{0}', space=vmem, size = 0x4000, scoped, tag = 'input window, operand 4, single buffered']
    %12 = vsyncpa [#allocation3], 0
    %13 = vsyncpa [#allocation5], 0
    // Predicated region
    $region2: #{tpu_custom_call.1} parent=1 // pred_check
      _
    $region3: #{tpu_custom_call.1} parent=1 // pred_check_branch
      %15 = sbr.rel (0) target = $region5
    $region4: #{tpu_custom_call.1} parent=1 // pred_region
      _
    $region5: #{tpu_custom_call.1} parent=1 // pred_fallthru
      _
    // Predicated region
    $region6: #{tpu_custom_call.1} parent=1 // pred_check
      _
    $region7: #{tpu_custom_call.1} parent=1 // pred_check_branch
      %17 = sbr.rel (0) target = $region9
    $region8: #{tpu_custom_call.1} parent=1 // pred_region
      %s19 = ssub.s32 256, 256
      %20 = vsyncadd [#allocation3], %s19
      %s21 = sshll.u32 [#allocation2], 4
      %s22 = int_to_ptr.vmem [resolvable:$true] %s21
      %27 = dma.hbm_to_vmem [thread:$0]  %s1, 256, %s22, [#allocation3], 32, 32, 2
    $region9: #{tpu_custom_call.1} parent=1 // pred_fallthru
      _
    // Predicated region
    $region10: #{tpu_custom_call.1} parent=1 // pred_check
      _
    $region11: #{tpu_custom_call.1} parent=1 // pred_check_branch
      %29 = sbr.rel (0) target = $region13
    $region12: #{tpu_custom_call.1} parent=1 // pred_region
      _
    $region13: #{tpu_custom_call.1} parent=1 // pred_fallthru
      _
    // Predicated region
    $region14: #{tpu_custom_call.1} parent=1 // pred_check
      _
    $region15: #{tpu_custom_call.1} parent=1 // pred_check_branch
      %31 = sbr.rel (0) target = $region17
    $region16: #{tpu_custom_call.1} parent=1 // pred_region
      %s33 = ssub.s32 512, 512
      %34 = vsyncadd [#allocation5], %s33
      %s35 = sshll.u32 [#allocation4], 4
      %s36 = int_to_ptr.vmem [resolvable:$true] %s35
      %41 = dma.hbm_to_vmem [thread:$0]  %s3, 512, %s36, [#allocation5], 128, 128, 8
    $region17: #{tpu_custom_call.1} parent=1 // pred_fallthru
      _
    // Predicated region
    $region18: #{tpu_custom_call.1} parent=1 // pred_check
      _
    $region19: #{tpu_custom_call.1} parent=1 // pred_check_branch
      %43 = sbr.rel (0) target = $region21
    $region20: #{tpu_custom_call.1} parent=1 // pred_region
      %s45 = ssub.s32 512, 512
      %46 = vsyncadd [#allocation5], %s45
      %s47 = sshll.u32 [#allocation6], 4
      %s48 = int_to_ptr.vmem [resolvable:$true] %s47
      %53 = dma.hbm_to_vmem [thread:$0]  %s4, 512, %s48, [#allocation5], 128, 128, 8
    $region21: #{tpu_custom_call.1} parent=1 // pred_fallthru
      _
    // Predicated region
    $region22: #{tpu_custom_call.1} parent=1 // pred_check
      _
    $region23: #{tpu_custom_call.1} parent=1 // pred_check_branch
      %55 = sbr.rel (0) target = $region25
    $region24: #{tpu_custom_call.1} parent=1 // pred_region
      _
    $region25: #{tpu_custom_call.1} parent=1 // pred_fallthru
      _
    // Predicated region
    $region26: #{tpu_custom_call.1} parent=1 // pred_check
      _
    $region27: #{tpu_custom_call.1} parent=1 // pred_check_branch
      %57 = sbr.rel (0) target = $region29
    $region28: #{tpu_custom_call.1} parent=1 // pred_region
      _
    $region29: #{tpu_custom_call.1} parent=1 // pred_fallthru
      _
    // Predicated region
    $region30: #{tpu_custom_call.1} parent=1 // pred_check
      _
    $region31: #{tpu_custom_call.1} parent=1 // pred_check_branch
      %59 = sbr.rel (0) target = $region33
    $region32: #{tpu_custom_call.1} parent=1 // pred_region
      %60 = dma.done [#allocation3], 256
    $region33: #{tpu_custom_call.1} parent=1 // pred_fallthru
      _
    // Predicated region
    $region34: #{tpu_custom_call.1} parent=1 // pred_check
      _
    $region35: #{tpu_custom_call.1} parent=1 // pred_check_branch
      %62 = sbr.rel (0) target = $region37
    $region36: #{tpu_custom_call.1} parent=1 // pred_region
      %63 = dma.done [#allocation5], 512
    $region37: #{tpu_custom_call.1} parent=1 // pred_fallthru
      _
    // Predicated region
    $region38: #{tpu_custom_call.1} parent=1 // pred_check
      _
    $region39: #{tpu_custom_call.1} parent=1 // pred_check_branch
      %65 = sbr.rel (0) target = $region41
    $region40: #{tpu_custom_call.1} parent=1 // pred_region
      %66 = dma.done [#allocation5], 512
    $region41: #{tpu_custom_call.1} parent=1 // pred_fallthru
      _
    %v67 = vld [vmem:[%s0] sm:$0x3]
    %v68 = vld [vmem:[#allocation4] sm:$0xff]
    %v69 = vld [vmem:[#allocation4 + $0x8] sm:$0xff]
    %v70 = vld [vmem:[#allocation4 + $0x10] sm:$0xff]
    %v71 = vld [vmem:[#allocation4 + $0x18] sm:$0xff]
    %v72 = vld [vmem:[%s5] sm:$0x1]
    %v74 = vlaneseq
    %v75 = vshrl.u32 %v74, 7
    %v76 = vsub.s32 0, %v75
    %v77 = vrot.slane %v72, %v76
    %vm79 = vcmask 261120
    %v81 = vsel %vm79, %v67, 0
    %83 = vmatprep.subr.mxu0 0.0
    %84 = vmatpush1.msra.mxu0 %v68
    %85 = vmatprep.subr.mxu0 0.0
    %86 = vmatpush1.msra.mxu0 %v69
    %87 = vmatprep.subr.mxu0 0.0
    %88 = vmatpush1.msra.mxu0 %v70
    %89 = vmatprep.subr.mxu0 0.0
    %90 = vmatpush1.msra.mxu0 %v71
    %91 = vmatprep.subr.mxu0 0.0
    %92 = vmatpush1.msra.mxu0 0.0
    %93 = vmatprep.subr.mxu0 0.0
    %94 = vmatpush1.msra.mxu0 0.0
    %95 = vmatprep.subr.mxu0 0.0
    %96 = vmatpush1.msra.mxu0 0.0
    %97 = vmatprep.subr.mxu0 0.0
    %98 = vmatpush1.msra.mxu0 0.0
    %99 = vmatprep.subr.mxu0 0.0
    %100 = vmatpush1.msra.mxu0 0.0
    %101 = vmatprep.subr.mxu0 0.0
    %102 = vmatpush1.msra.mxu0 0.0
    %103 = vmatprep.subr.mxu0 0.0
    %104 = vmatpush1.msra.mxu0 0.0
    %105 = vmatprep.subr.mxu0 0.0
    %106 = vmatpush1.msra.mxu0 0.0
    %107 = vmatprep.subr.mxu0 0.0
    %108 = vmatpush1.msra.mxu0 0.0
    %109 = vmatprep.subr.mxu0 0.0
    %110 = vmatpush1.msra.mxu0 0.0
    %111 = vmatprep.subr.mxu0 0.0
    %112 = vmatpush1.msra.mxu0 0.0
    %113 = vmatprep.subr.mxu0 0.0
    %114 = vmatpush1.msra.mxu0 0.0
    %115 = vmatprep.subr.mxu0 0.0
    %116 = vmatpush1.msra.mxu0 0.0
    %117 = vmatprep.subr.mxu0 0.0
    %118 = vmatpush1.msra.mxu0 0.0
    %119 = vmatprep.subr.mxu0 0.0
    %120 = vmatpush1.msra.mxu0 0.0
    %121 = vmatprep.subr.mxu0 0.0
    %122 = vmatpush1.msra.mxu0 0.0
    %123 = vmatprep.subr.mxu0 0.0
    %124 = vmatpush1.msra.mxu0 0.0
    %125 = vmatprep.subr.mxu0 0.0
    %126 = vmatpush1.msra.mxu0 0.0
    %127 = vmatprep.subr.mxu0 0.0
    %128 = vmatpush1.msra.mxu0 0.0
    %129 = vmatprep.subr.mxu0 0.0
    %130 = vmatpush1.msra.mxu0 0.0
    %131 = vmatprep.subr.mxu0 0.0
    %132 = vmatpush1.msra.mxu0 0.0
    %133 = vmatprep.subr.mxu0 0.0
    %134 = vmatpush1.msra.mxu0 0.0
    %135 = vmatprep.subr.mxu0 0.0
    %136 = vmatpush1.msra.mxu0 0.0
    %137 = vmatprep.subr.mxu0 0.0
    %138 = vmatpush1.msra.mxu0 0.0
    %139 = vmatprep.subr.mxu0 0.0
    %140 = vmatpush1.msra.mxu0 0.0
    %141 = vmatprep.subr.mxu0 0.0
    %142 = vmatpush1.msra.mxu0 0.0
    %143 = vmatprep.subr.mxu0 0.0
    %144 = vmatpush1.msra.mxu0 0.0
    %145 = vmatprep.subr.mxu0 0.0
    %146 = vmatpush1.msra.mxu0 0.0
    %147 = vmatprep.mubr.f32.mxu0 0.0
    %148 = vmatmul.mubr.f32.gmra.mrb[0].mxu0 %v81
    %v149 = vpop.f32.mrb[0].mxu0
    %v150 = vadd.f32 %v77, %v149
    %v151 = vpop.f32.mrb[0].mxu0
    %152 = vdwg.mxu0
    %v153 = vld [vmem:[#allocation2] sm:$0x3]
    %v154 = vld [vmem:[#allocation2 + $0x2] sm:$0x3]
    %v155 = vld [vmem:[#allocation2 + $0x4] sm:$0x3]
    %v156 = vld [vmem:[#allocation2 + $0x6] sm:$0x3]
    %v157 = vld [vmem:[#allocation2 + $0x8] sm:$0x3]
    %v158 = vld [vmem:[#allocation2 + $0xa] sm:$0x3]
    %v159 = vld [vmem:[#allocation2 + $0xc] sm:$0x3]
    %v160 = vld [vmem:[#allocation2 + $0xe] sm:$0x3]
    %v161 = vld [vmem:[#allocation6] sm:$0xff]
    %v162 = vld [vmem:[#allocation6 + $0x8] sm:$0xff]
    %v163 = vld [vmem:[#allocation6 + $0x10] sm:$0xff]
    %v164 = vld [vmem:[#allocation6 + $0x18] sm:$0xff]
    %v173 = vcombine.low %v153, %v154
    %v174 = vcombine.low %v155, %v156
    %v176 = vunpack.c.l.s4 1983009808
    %v177 = vunpack.c.0.s8 %v176
    %v178 = vlaneseq
    %v179 = vshrl.u32 %v178, 7
    %v180 = vsub.s32 %v177, %v179
    %v181 = vrot.slane %v173, %v180
    %v183 = vunpack.c.l.s4 1983009808
    %v184 = vunpack.c.0.s8 %v183
    %v185 = vlaneseq
    %v186 = vshrl.u32 %v185, 7
    %v187 = vsub.s32 %v184, %v186
    %v188 = vrot.slane %v174, %v187
    %v189 = vcombine.low %v181, %v188
    %v190 = vcombine.low %v157, %v158
    %v191 = vcombine.low %v159, %v160
    %v193 = vunpack.c.l.s4 1983009808
    %v194 = vunpack.c.0.s8 %v193
    %v195 = vlaneseq
    %v196 = vshrl.u32 %v195, 7
    %v197 = vsub.s32 %v194, %v196
    %v198 = vrot.slane %v190, %v197
    %v200 = vunpack.c.l.s4 1983009808
    %v201 = vunpack.c.0.s8 %v200
    %v202 = vlaneseq
    %v203 = vshrl.u32 %v202, 7
    %v204 = vsub.s32 %v201, %v203
    %v205 = vrot.slane %v191, %v204
    %v206 = vcombine.low %v198, %v205
    %v207 = vsel %vm79, %v189, 0
    %v209 = vsel %vm79, %v206, 0
    %211 = vmatprep.subr.mxu0 0.0
    %212 = vmatpush1.msra.mxu0 %v161
    %213 = vmatprep.subr.mxu0 0.0
    %214 = vmatpush1.msra.mxu0 %v162
    %215 = vmatprep.subr.mxu0 0.0
    %216 = vmatpush1.msra.mxu0 %v163
    %217 = vmatprep.subr.mxu0 0.0
    %218 = vmatpush1.msra.mxu0 %v164
    %219 = vmatprep.subr.mxu0 0.0
    %220 = vmatpush1.msra.mxu0 0.0
    %221 = vmatprep.subr.mxu0 0.0
    %222 = vmatpush1.msra.mxu0 0.0
    %223 = vmatprep.subr.mxu0 0.0
    %224 = vmatpush1.msra.mxu0 0.0
    %225 = vmatprep.subr.mxu0 0.0
    %226 = vmatpush1.msra.mxu0 0.0
    %227 = vmatprep.subr.mxu0 0.0
    %228 = vmatpush1.msra.mxu0 0.0
    %229 = vmatprep.subr.mxu0 0.0
    %230 = vmatpush1.msra.mxu0 0.0
    %231 = vmatprep.subr.mxu0 0.0
    %232 = vmatpush1.msra.mxu0 0.0
    %233 = vmatprep.subr.mxu0 0.0
    %234 = vmatpush1.msra.mxu0 0.0
    %235 = vmatprep.subr.mxu0 0.0
    %236 = vmatpush1.msra.mxu0 0.0
    %237 = vmatprep.subr.mxu0 0.0
    %238 = vmatpush1.msra.mxu0 0.0
    %239 = vmatprep.subr.mxu0 0.0
    %240 = vmatpush1.msra.mxu0 0.0
    %241 = vmatprep.subr.mxu0 0.0
    %242 = vmatpush1.msra.mxu0 0.0
    %243 = vmatprep.subr.mxu0 0.0
    %244 = vmatpush1.msra.mxu0 0.0
    %245 = vmatprep.subr.mxu0 0.0
    %246 = vmatpush1.msra.mxu0 0.0
    %247 = vmatprep.subr.mxu0 0.0
    %248 = vmatpush1.msra.mxu0 0.0
    %249 = vmatprep.subr.mxu0 0.0
    %250 = vmatpush1.msra.mxu0 0.0
    %251 = vmatprep.subr.mxu0 0.0
    %252 = vmatpush1.msra.mxu0 0.0
    %253 = vmatprep.subr.mxu0 0.0
    %254 = vmatpush1.msra.mxu0 0.0
    %255 = vmatprep.subr.mxu0 0.0
    %256 = vmatpush1.msra.mxu0 0.0
    %257 = vmatprep.subr.mxu0 0.0
    %258 = vmatpush1.msra.mxu0 0.0
    %259 = vmatprep.subr.mxu0 0.0
    %260 = vmatpush1.msra.mxu0 0.0
    %261 = vmatprep.subr.mxu0 0.0
    %262 = vmatpush1.msra.mxu0 0.0
    %263 = vmatprep.subr.mxu0 0.0
    %264 = vmatpush1.msra.mxu0 0.0
    %265 = vmatprep.subr.mxu0 0.0
    %266 = vmatpush1.msra.mxu0 0.0
    %267 = vmatprep.subr.mxu0 0.0
    %268 = vmatpush1.msra.mxu0 0.0
    %269 = vmatprep.subr.mxu0 0.0
    %270 = vmatpush1.msra.mxu0 0.0
    %271 = vmatprep.subr.mxu0 0.0
    %272 = vmatpush1.msra.mxu0 0.0
    %273 = vmatprep.subr.mxu0 0.0
    %274 = vmatpush1.msra.mxu0 0.0
    %275 = vmatprep.mubr.f32.mxu0 0.0
    %276 = vmatmul.mubr.f32.gmra.mrb[0].mxu0 %v207
    %v277 = vpop.f32.mrb[0].mxu0
    %v278 = vadd.f32 0.0, %v277
    %v279 = vpop.f32.mrb[0].mxu0
    %280 = vmatprep.mubr.f32.mxu0 0.0
    %281 = vmatmul.mubr.f32.gmra.mrb[0].mxu0 %v209
    %v282 = vpop.f32.mrb[0].mxu0
    %v283 = vadd.f32 0.0, %v282
    %v284 = vpop.f32.mrb[0].mxu0
    %285 = vdwg.mxu0
    %v288 = vcombine.high %v278, %v278
    %v290 = vunpack.c.l.s4 1983009808
    %v291 = vunpack.c.0.s8 %v290
    %v292 = vlaneseq
    %v293 = vshrl.u32 %v292, 7
    %v294 = vsub.s32 %v291, %v293
    %v295 = vrot.slane %v278, %v294
    %v297 = vunpack.c.l.s4 1983009808
    %v298 = vunpack.c.0.s8 %v297
    %v299 = vlaneseq
    %v300 = vshrl.u32 %v299, 7
    %v301 = vsub.s32 %v298, %v300
    %v302 = vrot.slane %v288, %v301
    %v303 = vcombine.high %v295, %v295
    %v304 = vcombine.high %v302, %v302
    %v305 = vcombine.high %v283, %v283
    %v307 = vunpack.c.l.s4 1983009808
    %v308 = vunpack.c.0.s8 %v307
    %v309 = vlaneseq
    %v310 = vshrl.u32 %v309, 7
    %v311 = vsub.s32 %v308, %v310
    %v312 = vrot.slane %v283, %v311
    %v314 = vunpack.c.l.s4 1983009808
    %v315 = vunpack.c.0.s8 %v314
    %v316 = vlaneseq
    %v317 = vshrl.u32 %v316, 7
    %v318 = vsub.s32 %v315, %v317
    %v319 = vrot.slane %v305, %v318
    %v320 = vcombine.high %v312, %v312
    %v321 = vcombine.high %v319, %v319
    %v330 = vadd.f32 %v295, %v150
    %v331 = vadd.f32 %v303, %v150
    %v332 = vadd.f32 %v302, %v150
    %v333 = vadd.f32 %v304, %v150
    %v334 = vadd.f32 %v312, %v150
    %v335 = vadd.f32 %v320, %v150
    %v336 = vadd.f32 %v319, %v150
    %v337 = vadd.f32 %v321, %v150
    %v338 = vtanh.pop %v330
    %v339 = vtanh.pop %v331
    %v340 = vtanh.pop %v332
    %v341 = vtanh.pop %v333
    %v342 = vtanh.pop %v334
    %v343 = vtanh.pop %v335
    %v344 = vtanh.pop %v336
    %v345 = vtanh.pop %v337
    %v346 = vld [vmem:[%s6] sm:$0x1]
    %v348 = vlaneseq
    %v349 = vshrl.u32 %v348, 7
    %v350 = vsub.s32 0, %v349
    %v351 = vrot.slane %v346, %v350
    %v353 = vmul.f32 %v338, %v351
    %v354 = vmul.f32 %v339, %v351
    %v355 = vmul.f32 %v340, %v351
    %v356 = vmul.f32 %v341, %v351
    %v357 = vmul.f32 %v342, %v351
    %v358 = vmul.f32 %v343, %v351
    %v359 = vmul.f32 %v344, %v351
    %v360 = vmul.f32 %v345, %v351
    %vm361 = vcmask 254976
    %v362 = vsel %vm361, %v353, 0.0
    %363 = vadd.xlane.f32.xlu0 %v362
    %v364 = vpop.xlane.xlu0 %363
    %v365 = vsel %vm361, %v354, 0.0
    %366 = vadd.xlane.f32.xlu0 %v365
    %v367 = vpop.xlane.xlu0 %366
    %v368 = vsel %vm361, %v355, 0.0
    %369 = vadd.xlane.f32.xlu0 %v368
    %v370 = vpop.xlane.xlu0 %369
    %v371 = vsel %vm361, %v356, 0.0
    %372 = vadd.xlane.f32.xlu0 %v371
    %v373 = vpop.xlane.xlu0 %372
    %v374 = vsel %vm361, %v357, 0.0
    %375 = vadd.xlane.f32.xlu0 %v374
    %v376 = vpop.xlane.xlu0 %375
    %v377 = vsel %vm361, %v358, 0.0
    %378 = vadd.xlane.f32.xlu0 %v377
    %v379 = vpop.xlane.xlu0 %378
    %v380 = vsel %vm361, %v359, 0.0
    %381 = vadd.xlane.f32.xlu0 %v380
    %v382 = vpop.xlane.xlu0 %381
    %v383 = vsel %vm361, %v360, 0.0
    %384 = vadd.xlane.f32.xlu0 %v383
    %v385 = vpop.xlane.xlu0 %384
    %v386 = vld [vmem:[%s2] sm:$0xff]
    %vm387 = vcmp.eq.s32.totalorder %v386, 0
    %v396 = vlaneseq
    %v397 = vand.u32 %v396, 127
    %v398 = vlaneseq
    %v399 = vshrl.u32 %v398, 7
    %v400 = vsub.s32 %v397, %v399
    %v401 = vrot.slane %v364, %v400
    %v402 = vlaneseq
    %v403 = vshrl.u32 %v402, 7
    %v404 = vsub.s32 %v397, %v403
    %v405 = vrot.slane %v367, %v404
    %v406 = vlaneseq
    %v407 = vshrl.u32 %v406, 7
    %v408 = vsub.s32 %v397, %v407
    %v409 = vrot.slane %v370, %v408
    %v410 = vlaneseq
    %v411 = vshrl.u32 %v410, 7
    %v412 = vsub.s32 %v397, %v411
    %v413 = vrot.slane %v373, %v412
    %v414 = vlaneseq
    %v415 = vshrl.u32 %v414, 7
    %v416 = vsub.s32 %v397, %v415
    %v417 = vrot.slane %v376, %v416
    %v418 = vlaneseq
    %v419 = vshrl.u32 %v418, 7
    %v420 = vsub.s32 %v397, %v419
    %v421 = vrot.slane %v379, %v420
    %v422 = vlaneseq
    %v423 = vshrl.u32 %v422, 7
    %v424 = vsub.s32 %v397, %v423
    %v425 = vrot.slane %v382, %v424
    %v426 = vlaneseq
    %v427 = vshrl.u32 %v426, 7
    %v428 = vsub.s32 %v397, %v427
    %v429 = vrot.slane %v385, %v428
    %vm430 = vcmask 1041409
    %v431 = vsel %vm430, %v405, %v401
    %vm432 = vcmask 1042434
    %v433 = vsel %vm432, %v409, %v431
    %vm434 = vcmask 1043459
    %v435 = vsel %vm434, %v413, %v433
    %vm436 = vcmask 1044484
    %v437 = vsel %vm436, %v417, %v435
    %vm438 = vcmask 1045509
    %v439 = vsel %vm438, %v421, %v437
    %vm440 = vcmask 1046534
    %v441 = vsel %vm440, %v425, %v439
    %vm442 = vcmask 1047559
    %v443 = vsel %vm442, %v429, %v441
    %v445 = vsel %vm387, -1e-10, %v443
    %vm446 = vcmask 15360
    %v447 = vsel %vm446, %v445, -inf
    %v448 = vrot.slane %v447, 4
    %v449 = vmax.f32 %v447, %v448
    %v450 = vrot.slane %v449, 2
    %v451 = vmax.f32 %v449, %v450
    %v452 = vrot.slane %v451, 1
    %v453 = vmax.f32 %v451, %v452
    %v454 = vsub.f32 %v445, %v453
    %v455 = vmul.f32 %v454, 1.442695
    %v456 = vpow.pop %v455
    %v457 = vsel %vm446, %v456, 0.0
    %v458 = vrot.slane %v457, 4
    %v459 = vadd.f32 %v457, %v458
    %v460 = vrot.slane %v459, 2
    %v461 = vadd.f32 %v459, %v460
    %v462 = vrot.slane %v461, 1
    %v463 = vadd.f32 %v461, %v462
    %v464 = vrcp.pop %v463
    %v465 = vmul.f32 %v456, %v464
    %466 = vst.msk [vmem:[%s7] sm:$0xff] %vm446, %v465
    // Predicated region
    $region42: #{tpu_custom_call.1} parent=1 // pred_check
      _
    $region43: #{tpu_custom_call.1} parent=1 // pred_check_branch
      %468 = sbr.rel (0) target = $region45
    $region44: #{tpu_custom_call.1} parent=1 // pred_region
      _
    $region45: #{tpu_custom_call.1} parent=1 // pred_fallthru
      _
    // Predicated region
    $region46: #{tpu_custom_call.1} parent=1 // pred_check
      _
    $region47: #{tpu_custom_call.1} parent=1 // pred_check_branch
      %470 = sbr.rel (0) target = $region49
    $region48: #{tpu_custom_call.1} parent=1 // pred_region
      _
    $region49: #{tpu_custom_call.1} parent=1 // pred_fallthru
      _
    %471 = vsyncpa [#allocation3], 1
    %472 = vsyncpa [#allocation5], 1

</llo_original>
